<compile_context>
chip_gen: v6e
topology: v6e:2x2x1
jax: 0.10.0
libtpu: 0.0.40
codegen_flags: <defaults>
</compile_context>

<pallas_src>
import math

import jax
import jax.numpy as jnp
from jax.experimental import pallas as pl
from jax.experimental.pallas import tpu as pltpu


def _resolve_shape(total, shape):
    """Replicate torch.Tensor.view shape semantics (single -1 allowed)."""
    shape = list(shape)
    neg = [i for i, s in enumerate(shape) if s == -1]
    if len(neg) > 1:
        raise ValueError("only one dimension can be inferred")
    if neg:
        known = 1
        for i, s in enumerate(shape):
            if i != neg[0]:
                known *= s
        if known == 0 or total % known != 0:
            raise ValueError(f"shape {shape} is invalid for input of size {total}")
        shape[neg[0]] = total // known
    if math.prod(shape) != total:
        raise ValueError(f"shape {shape} is invalid for input of size {total}")
    return tuple(shape)


def _dma_copy_kernel(x_hbm_ref, o_hbm_ref, copy_sem):
    # Single whole-array HBM->HBM DMA; the DMA engine streams at the HBM
    # roofline with no VMEM round-trip and no vld/vst vreg traffic.
    cp = pltpu.make_async_copy(x_hbm_ref, o_hbm_ref, copy_sem)
    cp.start()
    cp.wait()


def _materialized_copy(x):
    """Physically copy `x` via one HBM->HBM DMA issued from a Pallas kernel."""
    total = x.size
    itemsize = jnp.dtype(x.dtype).itemsize
    return pl.pallas_call(
        _dma_copy_kernel,
        out_shape=jax.ShapeDtypeStruct(x.shape, x.dtype),
        in_specs=[pl.BlockSpec(memory_space=pl.ANY)],
        out_specs=pl.BlockSpec(memory_space=pl.ANY),
        scratch_shapes=[pltpu.SemaphoreType.DMA],
        cost_estimate=pl.CostEstimate(
            flops=0,
            transcendentals=0,
            bytes_accessed=2 * total * itemsize,
        ),
    )(x)


def reshape_pallas(x, shape, *, materialize=False):
    """Equivalent of `x.view(shape)` (row-major / C order).

    Default: metadata-only reshape (matches torch .view, zero HBM traffic).
    materialize=True: force a physical copy via a single HBM->HBM DMA kernel,
    then re-interpret the contiguous result with the requested view shape.
    """
    total = x.size
    out_shape = _resolve_shape(total, shape)
    if total == 0 or not materialize:
        # Contiguous row-major reshape is metadata-only — skip the kernel.
        return jnp.reshape(x, out_shape)
    copied = _materialized_copy(x)
    # Metadata-only re-interpretation of the contiguous copy.
    return copied.reshape(out_shape)


class Reshape:
    """JAX/Pallas mirror of the PyTorch Reshape nn.Module."""

    def __init__(self, *args, materialize=False):
        self.shape = args
        self.materialize = materialize

    def __call__(self, x):
        return reshape_pallas(x, self.shape, materialize=self.materialize)


if __name__ == "__main__":
    key = jax.random.PRNGKey(0)

    # Small NCHW input consistent with a CAE feature map: (B=2, C=4, H=16, W=16)
    x = jax.random.normal(key, (2, 4, 16, 16), dtype=jnp.float32)
    ref = x.reshape(2, -1)

    # Default (fast) path: metadata-only reshape, no kernel.
    y_fast = jax.block_until_ready(Reshape(2, -1)(x))
    assert y_fast.shape == (2, 4 * 16 * 16), y_fast.shape
    assert y_fast.dtype == x.dtype
    assert bool(jnp.array_equal(y_fast, ref))

    # Materializing path: exercises the Pallas HBM->HBM DMA copy kernel.
    y_kernel = jax.block_until_ready(Reshape(2, -1, materialize=True)(x))
    assert y_kernel.shape == (2, 4 * 16 * 16), y_kernel.shape
    assert y_kernel.dtype == x.dtype
    assert bool(jnp.array_equal(y_kernel, ref))

    # Lane-unaligned element count (3*5*7 = 105): whole-array DMA handles it
    # with no VMEM padding or masked-tail concerns.
    x2 = jax.random.normal(jax.random.PRNGKey(1), (3, 5, 7), dtype=jnp.float32)
    y2 = jax.block_until_ready(Reshape(5, -1, materialize=True)(x2))
    assert bool(jnp.array_equal(y2, x2.reshape(5, 21)))

    print("KERNEL_OK")
</pallas_src>

<mosaic_0001>
module attributes {stable_mosaic.version = 11 : i64} {
  func.func @_dma_copy_kernel(%arg0: memref<2x4x16x16xf32, #tpu.memory_space<any>>, %arg1: memref<2x4x16x16xf32, #tpu.memory_space<any>>, %arg2: memref<!tpu.dma_semaphore, #tpu.memory_space<semaphore_mem>>) attributes {dimension_semantics = [], scalar_prefetch = 0 : i64, scratch_operands = 1 : i64, tpu.core_type = #tpu.core_type<tc>} {
    tpu.enqueue_dma source(%arg0 : memref<2x4x16x16xf32, #tpu.memory_space<any>>) target(%arg1 : memref<2x4x16x16xf32, #tpu.memory_space<any>>) target_semaphore(%arg2 : memref<!tpu.dma_semaphore, #tpu.memory_space<semaphore_mem>>)
    tpu.wait_dma2 semaphore(%arg2 : memref<!tpu.dma_semaphore, #tpu.memory_space<semaphore_mem>>) src(%arg0 : memref<2x4x16x16xf32, #tpu.memory_space<any>>) dst(%arg1 : memref<2x4x16x16xf32, #tpu.memory_space<any>>)
    return
  }
}

</mosaic_0001>

<llo_original>
// kernel: tpu_custom_call.1
$region0: #{tpu_custom_call.1}
  #allocation0 [shape = 'u32[]', space=smem, size = 0x4, offset = 0x4, fixed_abs, tag = 'smem constant byte address 0x4 - core index']
  #allocation1 [shape = 'u32[144,128]{1,0:T(1,128)}', space=vmem, size = 0x12000, scoped, tag = 'internal scratch']
  #allocation2 [shape = 's32[1]{0}', space=sflag, size = 0x4, scoped, tag = 'scratch operand']
  #allocation3 [shape = 's32[]', space=sflag, size = 0x4, offset = 0, fixed_abs, tag = 'sflag constant byte address 0x0 - dummy sync flag']
  #allocation4 [shape = 'u32[0]{0}', space=smem, size = 0, offset = 0, fixed_abs, tag = 'smem constant byte address 0x0 - null']
  %s0 = inlined_call_operand.hbm [shape: f32[2,4,16,16], index: 0, kind: input, shape index: {}]
  %s1 = inlined_call_operand.hbm [shape: f32[2,4,16,16], index: 1, kind: output, shape index: {}]
  %s2 = sld [smem:[#allocation0]]
  $region2: #{tpu_custom_call.1} parent=0
    _
  %s4 = ssub.s32 1, %s2
  %s5 = scalar_select 0, %s4, %s2
  %s7 = sshll.u32 1, 14
  %s8 = sxor.u32 4294967295, %s7
  %12 = dma.general %s0, 2048, %s1, [#allocation2], 131072, [#allocation4], 0, 0
  %s13 = smul.u32 2, 4
  %s14 = smul.u32 %s13, 16
  %s15 = smul.u32 %s14, 1
  %s16 = sshll.u32 %s15, 4
  %17 = dma.done [#allocation2], %s16
  %18 = vsyncmov [#allocation2]
  %s19 = vpop.sfrf %18
  %p20 = scmp.eq.s32.totalorder %s19, 0
  %p21 = pneg %p20
  %23 = shalt.err (%p21)

</llo_original>
